<compile_context>
chip_gen: v5e
topology: v5e:2x2
jax: 0.10.0
libtpu: 0.0.40
codegen_flags: <defaults>
</compile_context>

<pallas_src>
import functools

import jax
import jax.numpy as jnp
from jax.experimental import pallas as pl
from jax.experimental.pallas import tpu as pltpu


def _round_up(x: int, m: int) -> int:
    return (x + m - 1) // m * m


def _ntxent_kernel(zrow_ref, zpos_ref, zcol_ref, out_ref, denom_ref, pos_ref, *,
                   inv_temp: float, tm: int, tn: int, b_valid: int, b_pad: int,
                   mask_cols: bool, mm_dtype):
    i = pl.program_id(0)          # row tile
    j = pl.program_id(1)          # column tile (streamed reduction axis)

    # --- L2-normalize the row block in f32 (F.normalize(dim=1), eps=1e-12). ---
    er = zrow_ref[...].astype(jnp.float32)
    zr = er * jax.lax.rsqrt(
        jnp.maximum(jnp.sum(er * er, axis=1, keepdims=True), 1e-24))

    # --- First column step: reset accumulator, positives as paired-row dots. ---
    @pl.when(j == 0)
    def _init():
        denom_ref[...] = jnp.zeros_like(denom_ref)
        ep = zpos_ref[...].astype(jnp.float32)
        zp = ep * jax.lax.rsqrt(
            jnp.maximum(jnp.sum(ep * ep, axis=1, keepdims=True), 1e-24))
        pos_ref[...] = jnp.sum(zr * zp, axis=1, keepdims=True)

    # --- Normalize the column block; MXU matmul without transposing z. ---
    ec = zcol_ref[...].astype(jnp.float32)
    zc = ec * jax.lax.rsqrt(
        jnp.maximum(jnp.sum(ec * ec, axis=1, keepdims=True), 1e-24))
    s = jax.lax.dot_general(
        zr.astype(mm_dtype), zc.astype(mm_dtype),
        dimension_numbers=(((1,), (1,)), ((), ())),
        preferred_element_type=jnp.float32)            # [TM, TN] cosine sims
    e = jnp.exp(s * inv_temp)

    if mask_cols:
        # Zero out padded (invalid) columns of the concatenated array.
        col_g = j * tn + jax.lax.broadcasted_iota(jnp.int32, (1, tn), 1)
        valid = (col_g < b_valid) | ((col_g >= b_pad) & (col_g < b_pad + b_valid))
        e = jnp.where(valid, e, 0.0)

    denom_ref[...] += jnp.sum(e, axis=1, keepdims=True)

    # --- negatives_mask = ~eye: subtract self-similarity on diagonal tiles only. ---
    row_start = i * tm
    col_start = j * tn

    @pl.when(jnp.logical_and(row_start < col_start + tn,
                             col_start < row_start + tm))
    def _remove_diag():
        rg = row_start + jax.lax.broadcasted_iota(jnp.int32, (tm, tn), 0)
        cg = col_start + jax.lax.broadcasted_iota(jnp.int32, (tm, tn), 1)
        denom_ref[...] -= jnp.sum(jnp.where(rg == cg, e, 0.0),
                                  axis=1, keepdims=True)

    # --- Last column step: per-row loss in log space. ---
    @pl.when(j == pl.num_programs(1) - 1)
    def _finalize():
        out_ref[...] = jnp.log(denom_ref[...]) - pos_ref[...] * inv_temp


def nt_xent_loss(emb_i, emb_j, temperature: float = 0.5, *,
                 row_tile: int = 256, mm_dtype=jnp.bfloat16):
    """NT-Xent loss matching the PyTorch NTXentLoss.forward semantics."""
    assert emb_i.shape == emb_j.shape and emb_i.ndim == 2
    b, d = emb_i.shape

    dp = _round_up(d, 128)                     # pad contraction dim to lane width
    tm = min(row_tile, _round_up(b, 8))        # row/col tile (multiple of 8)
    bp = _round_up(b, tm)                      # padded half-batch (tm | bp)
    n2 = 2 * bp
    tn = tm
    r_tiles = n2 // tm
    c_tiles = n2 // tn
    half_tiles = bp // tm                      # partner-row offset in tiles

    def _pad(x):
        return jnp.pad(x.astype(jnp.float32), ((0, bp - b), (0, dp - d)))

    # TODO(synk): when bp == b the concat/pad pass could be avoided by feeding
    # emb_i / emb_j as separate inputs with half-selecting index maps.
    z = jnp.concatenate([_pad(emb_i), _pad(emb_j)], axis=0)    # [2*bp, dp]

    kernel = functools.partial(
        _ntxent_kernel,
        inv_temp=1.0 / float(temperature), tm=tm, tn=tn,
        b_valid=b, b_pad=bp, mask_cols=(bp != b), mm_dtype=mm_dtype)

    row_spec = pl.BlockSpec((tm, dp), lambda i, j: (i, 0))
    pos_spec = pl.BlockSpec((tm, dp), lambda i, j: ((i + half_tiles) % r_tiles, 0))
    col_spec = pl.BlockSpec((tn, dp), lambda i, j: (j, 0))
    out_spec = pl.BlockSpec((tm, 1), lambda i, j: (i, 0))

    out = pl.pallas_call(
        kernel,
        out_shape=jax.ShapeDtypeStruct((n2, 1), jnp.float32),
        grid_spec=pltpu.PrefetchScalarGridSpec(
            num_scalar_prefetch=0,
            grid=(r_tiles, c_tiles),
            in_specs=[row_spec, pos_spec, col_spec],
            out_specs=out_spec,
            scratch_shapes=[pltpu.VMEM((tm, 1), jnp.float32),   # denom accumulator
                            pltpu.VMEM((tm, 1), jnp.float32)]), # positives
        compiler_params=pltpu.CompilerParams(
            dimension_semantics=("parallel", "arbitrary")),
    )(z, z, z)

    rows = out[:, 0]
    return (jnp.sum(rows[:b]) + jnp.sum(rows[bp:bp + b])) / (2.0 * b)


def _reference_loss(emb_i, emb_j, temperature=0.5):
    # Pure-JAX (f32) reference mirroring the PyTorch module.
    b = emb_i.shape[0]
    z_i = emb_i / jnp.maximum(jnp.linalg.norm(emb_i, axis=1, keepdims=True), 1e-12)
    z_j = emb_j / jnp.maximum(jnp.linalg.norm(emb_j, axis=1, keepdims=True), 1e-12)
    reps = jnp.concatenate([z_i, z_j], axis=0)
    sim = reps @ reps.T
    neg_mask = 1.0 - jnp.eye(2 * b)
    sim_ij = jnp.diagonal(sim, offset=b)
    sim_ji = jnp.diagonal(sim, offset=-b)
    positives = jnp.concatenate([sim_ij, sim_ji], axis=0)
    nom = jnp.exp(positives / temperature)
    denom = jnp.sum(neg_mask * jnp.exp(sim / temperature), axis=1)
    return jnp.sum(-jnp.log(nom / denom)) / (2 * b)


if __name__ == "__main__":
    key = jax.random.PRNGKey(0)
    k1, k2 = jax.random.split(key)
    B, D = 8, 32
    emb_i = jax.random.normal(k1, (B, D), dtype=jnp.float32)
    emb_j = jax.random.normal(k2, (B, D), dtype=jnp.float32)

    loss = nt_xent_loss(emb_i, emb_j, temperature=0.5)
    loss = jax.block_until_ready(loss)

    ref = _reference_loss(emb_i, emb_j, temperature=0.5)
    # bf16 MXU inputs (f32 accumulation) -> allow a small numeric tolerance.
    assert jnp.allclose(loss, ref, rtol=2e-2, atol=2e-2), (loss, ref)
    print("KERNEL_OK")
</pallas_src>

<mosaic_0001>
module attributes {stable_mosaic.version = 11 : i64} {
  func.func @_ntxent_kernel(%arg0: i32, %arg1: i32, %arg2: memref<8x128xf32, #tpu.memory_space<vmem>>, %arg3: memref<8x128xf32, #tpu.memory_space<vmem>>, %arg4: memref<8x128xf32, #tpu.memory_space<vmem>>, %arg5: memref<8x1xf32, #tpu.memory_space<vmem>>, %arg6: memref<8x1xf32, #tpu.memory_space<vmem>>, %arg7: memref<8x1xf32, #tpu.memory_space<vmem>>) attributes {dimension_semantics = [#tpu.dimension_semantics<parallel>, #tpu.dimension_semantics<arbitrary>], iteration_bounds = array<i64: 2, 2>, scalar_prefetch = 0 : i64, scratch_operands = 2 : i64, tpu.core_type = #tpu.core_type<tc>, window_params = [{transform_indices = @transform_0, window_bounds = array<i64: 8, 128>}, {transform_indices = @transform_1, window_bounds = array<i64: 8, 128>}, {transform_indices = @transform_2, window_bounds = array<i64: 8, 128>}, {transform_indices = @transform_3, window_bounds = array<i64: 8, 1>}]} {
    %c0 = arith.constant 0 : index
    %c0_0 = arith.constant 0 : index
    %0 = vector.load %arg2[%c0, %c0_0] : memref<8x128xf32, #tpu.memory_space<vmem>>, vector<8x128xf32>
    %1 = arith.mulf %0, %0 : vector<8x128xf32>
    %cst = arith.constant dense<0.000000e+00> : vector<8xf32>
    %2 = vector.multi_reduction <add>, %1, %cst [1] : vector<8x128xf32> to vector<8xf32>
    %3 = vector.shape_cast %2 : vector<8xf32> to vector<8x1xf32>
    %cst_1 = arith.constant 1.000000e-24 : f32
    %4 = vector.broadcast %cst_1 : f32 to vector<8x1xf32>
    %5 = arith.maximumf %3, %4 : vector<8x1xf32>
    %6 = math.rsqrt %5 : vector<8x1xf32>
    %7 = vector.broadcast %6 : vector<8x1xf32> to vector<8x128xf32>
    %8 = arith.mulf %0, %7 : vector<8x128xf32>
    %c0_i32 = arith.constant 0 : i32
    %9 = arith.cmpi eq, %arg1, %c0_i32 : i32
    %10 = arith.extui %9 : i1 to i32
    %c0_i32_2 = arith.constant 0 : i32
    %11 = arith.cmpi ne, %10, %c0_i32_2 : i32
    scf.if %11 {
      %cst_19 = arith.constant 0.000000e+00 : f32
      %44 = vector.broadcast %cst_19 : f32 to vector<8x1xf32>
      %c0_20 = arith.constant 0 : index
      %c0_21 = arith.constant 0 : index
      %45 = vector.load %arg6[%c0_20, %c0_21] : memref<8x1xf32, #tpu.memory_space<vmem>>, vector<8x1xf32>
      tpu.vector_store %arg6[%c0_20, %c0_21], %44 {strides = array<i32>} : memref<8x1xf32, #tpu.memory_space<vmem>>, vector<8x1xf32>,
      %c0_22 = arith.constant 0 : index
      %c0_23 = arith.constant 0 : index
      %46 = vector.load %arg3[%c0_22, %c0_23] : memref<8x128xf32, #tpu.memory_space<vmem>>, vector<8x128xf32>
      %47 = arith.mulf %46, %46 : vector<8x128xf32>
      %cst_24 = arith.constant dense<0.000000e+00> : vector<8xf32>
      %48 = vector.multi_reduction <add>, %47, %cst_24 [1] : vector<8x128xf32> to vector<8xf32>
      %49 = vector.shape_cast %48 : vector<8xf32> to vector<8x1xf32>
      %cst_25 = arith.constant 1.000000e-24 : f32
      %50 = vector.broadcast %cst_25 : f32 to vector<8x1xf32>
      %51 = arith.maximumf %49, %50 : vector<8x1xf32>
      %52 = math.rsqrt %51 : vector<8x1xf32>
      %53 = vector.broadcast %52 : vector<8x1xf32> to vector<8x128xf32>
      %54 = arith.mulf %46, %53 : vector<8x128xf32>
      %55 = arith.mulf %8, %54 : vector<8x128xf32>
      %cst_26 = arith.constant dense<0.000000e+00> : vector<8xf32>
      %56 = vector.multi_reduction <add>, %55, %cst_26 [1] : vector<8x128xf32> to vector<8xf32>
      %57 = vector.shape_cast %56 : vector<8xf32> to vector<8x1xf32>
      %c0_27 = arith.constant 0 : index
      %c0_28 = arith.constant 0 : index
      %58 = vector.load %arg7[%c0_27, %c0_28] : memref<8x1xf32, #tpu.memory_space<vmem>>, vector<8x1xf32>
      tpu.vector_store %arg7[%c0_27, %c0_28], %57 {strides = array<i32>} : memref<8x1xf32, #tpu.memory_space<vmem>>, vector<8x1xf32>,
    } else {
    }
    %c0_3 = arith.constant 0 : index
    %c0_4 = arith.constant 0 : index
    %12 = vector.load %arg4[%c0_3, %c0_4] : memref<8x128xf32, #tpu.memory_space<vmem>>, vector<8x128xf32>
    %13 = arith.mulf %12, %12 : vector<8x128xf32>
    %cst_5 = arith.constant dense<0.000000e+00> : vector<8xf32>
    %14 = vector.multi_reduction <add>, %13, %cst_5 [1] : vector<8x128xf32> to vector<8xf32>
    %15 = vector.shape_cast %14 : vector<8xf32> to vector<8x1xf32>
    %cst_6 = arith.constant 1.000000e-24 : f32
    %16 = vector.broadcast %cst_6 : f32 to vector<8x1xf32>
    %17 = arith.maximumf %15, %16 : vector<8x1xf32>
    %18 = math.rsqrt %17 : vector<8x1xf32>
    %19 = vector.broadcast %18 : vector<8x1xf32> to vector<8x128xf32>
    %20 = arith.mulf %12, %19 : vector<8x128xf32>
    %21 = arith.truncf %8 : vector<8x128xf32> to vector<8x128xbf16>
    %22 = arith.truncf %20 : vector<8x128xf32> to vector<8x128xbf16>
    %cst_7 = arith.constant dense<0.000000e+00> : vector<8x8xf32>
    %23 = tpu.matmul %21, %22, %cst_7 {dimension_numbers = #tpu.dot_dimension_numbers<[1], [1], [0], [0], [0, 0, 1, 0], [], []>} : vector<8x128xbf16>, vector<8x128xbf16>, vector<8x8xf32> -> vector<8x8xf32>
    %cst_8 = arith.constant 2.000000e+00 : f32
    %24 = vector.broadcast %cst_8 : f32 to vector<8x8xf32>
    %25 = arith.mulf %23, %24 : vector<8x8xf32>
    %26 = math.exp %25 : vector<8x8xf32>
    %c0_9 = arith.constant 0 : index
    %c0_10 = arith.constant 0 : index
    %27 = vector.load %arg6[%c0_9, %c0_10] : memref<8x1xf32, #tpu.memory_space<vmem>>, vector<8x1xf32>
    %cst_11 = arith.constant dense<0.000000e+00> : vector<8xf32>
    %28 = vector.multi_reduction <add>, %26, %cst_11 [1] : vector<8x8xf32> to vector<8xf32>
    %29 = vector.shape_cast %28 : vector<8xf32> to vector<8x1xf32>
    %30 = arith.addf %27, %29 : vector<8x1xf32>
    %c0_12 = arith.constant 0 : index
    %c0_13 = arith.constant 0 : index
    %31 = vector.load %arg6[%c0_12, %c0_13] : memref<8x1xf32, #tpu.memory_space<vmem>>, vector<8x1xf32>
    tpu.vector_store %arg6[%c0_12, %c0_13], %30 {strides = array<i32>} : memref<8x1xf32, #tpu.memory_space<vmem>>, vector<8x1xf32>,
    %c8_i32 = arith.constant 8 : i32
    %32 = arith.muli %arg0, %c8_i32 : i32
    %c8_i32_14 = arith.constant 8 : i32
    %33 = arith.muli %arg1, %c8_i32_14 : i32
    %c8_i32_15 = arith.constant 8 : i32
    %34 = arith.addi %33, %c8_i32_15 : i32
    %35 = arith.cmpi slt, %32, %34 : i32
    %c8_i32_16 = arith.constant 8 : i32
    %36 = arith.addi %32, %c8_i32_16 : i32
    %37 = arith.cmpi slt, %33, %36 : i32
    %38 = arith.andi %35, %37 : i1
    %39 = arith.extui %38 : i1 to i32
    %c0_i32_17 = arith.constant 0 : i32
    %40 = arith.cmpi ne, %39, %c0_i32_17 : i32
    scf.if %40 {
      %44 = tpu.iota {dimensions = array<i32: 0>} : vector<8x8xi32>
      %45 = vector.broadcast %32 : i32 to vector<8x8xi32>
      %46 = arith.addi %45, %44 : vector<8x8xi32>
      %47 = tpu.iota {dimensions = array<i32: 1>} : vector<8x8xi32>
      %48 = vector.broadcast %33 : i32 to vector<8x8xi32>
      %49 = arith.addi %48, %47 : vector<8x8xi32>
      %c0_19 = arith.constant 0 : index
      %c0_20 = arith.constant 0 : index
      %50 = vector.load %arg6[%c0_19, %c0_20] : memref<8x1xf32, #tpu.memory_space<vmem>>, vector<8x1xf32>
      %51 = arith.cmpi eq, %46, %49 : vector<8x8xi32>
      %cst_21 = arith.constant 0.000000e+00 : f32
      %52 = vector.broadcast %cst_21 : f32 to vector<8x8xf32>
      %53 = arith.select %51, %26, %52 : vector<8x8xi1>, vector<8x8xf32>
      %cst_22 = arith.constant dense<0.000000e+00> : vector<8xf32>
      %54 = vector.multi_reduction <add>, %53, %cst_22 [1] : vector<8x8xf32> to vector<8xf32>
      %55 = vector.shape_cast %54 : vector<8xf32> to vector<8x1xf32>
      %56 = arith.subf %50, %55 : vector<8x1xf32>
      %c0_23 = arith.constant 0 : index
      %c0_24 = arith.constant 0 : index
      %57 = vector.load %arg6[%c0_23, %c0_24] : memref<8x1xf32, #tpu.memory_space<vmem>>, vector<8x1xf32>
      tpu.vector_store %arg6[%c0_23, %c0_24], %56 {strides = array<i32>} : memref<8x1xf32, #tpu.memory_space<vmem>>, vector<8x1xf32>,
    } else {
    }
    %c1_i32 = arith.constant 1 : i32
    %41 = arith.cmpi eq, %arg1, %c1_i32 : i32
    %42 = arith.extui %41 : i1 to i32
    %c0_i32_18 = arith.constant 0 : i32
    %43 = arith.cmpi ne, %42, %c0_i32_18 : i32
    scf.if %43 {
      %c0_19 = arith.constant 0 : index
      %c0_20 = arith.constant 0 : index
      %44 = vector.load %arg6[%c0_19, %c0_20] : memref<8x1xf32, #tpu.memory_space<vmem>>, vector<8x1xf32>
      %45 = math.log %44 : vector<8x1xf32>
      %c0_21 = arith.constant 0 : index
      %c0_22 = arith.constant 0 : index
      %46 = vector.load %arg7[%c0_21, %c0_22] : memref<8x1xf32, #tpu.memory_space<vmem>>, vector<8x1xf32>
      %cst_23 = arith.constant 2.000000e+00 : f32
      %47 = vector.broadcast %cst_23 : f32 to vector<8x1xf32>
      %48 = arith.mulf %46, %47 : vector<8x1xf32>
      %49 = arith.subf %45, %48 : vector<8x1xf32>
      %c0_24 = arith.constant 0 : index
      %c0_25 = arith.constant 0 : index
      %50 = vector.load %arg5[%c0_24, %c0_25] : memref<8x1xf32, #tpu.memory_space<vmem>>, vector<8x1xf32>
      tpu.vector_store %arg5[%c0_24, %c0_25], %49 {strides = array<i32>} : memref<8x1xf32, #tpu.memory_space<vmem>>, vector<8x1xf32>,
    } else {
    }
    return
  }
  func.func @transform_0(%arg0: i32, %arg1: i32) -> (i32, i32) {
    %c0_i32 = arith.constant 0 : i32
    %c0_i32_0 = arith.constant 0 : i32
    return %arg0, %c0_i32 : i32, i32
  }
  func.func @transform_1(%arg0: i32, %arg1: i32) -> (i32, i32) {
    %c1_i32 = arith.constant 1 : i32
    %0 = arith.addi %arg0, %c1_i32 : i32
    %c2_i32 = arith.constant 2 : i32
    %c0_i32 = arith.constant 0 : i32
    %1 = arith.cmpi eq, %c2_i32, %c0_i32 : i32
    %c1_i32_0 = arith.constant 1 : i32
    %2 = arith.select %1, %c1_i32_0, %c2_i32 : i32
    %3 = arith.remsi %0, %2 : i32
    %c0_i32_1 = arith.constant 0 : i32
    %4 = arith.cmpi ne, %3, %c0_i32_1 : i32
    %c0_i32_2 = arith.constant 0 : i32
    %5 = arith.cmpi slt, %3, %c0_i32_2 : i32
    %c0_i32_3 = arith.constant 0 : i32
    %6 = arith.cmpi slt, %2, %c0_i32_3 : i32
    %7 = arith.xori %5, %6 : i1
    %8 = arith.andi %7, %4 : i1
    %9 = arith.addi %3, %2 : i32
    %10 = arith.select %8, %9, %3 : i32
    %c0_i32_4 = arith.constant 0 : i32
    %c0_i32_5 = arith.constant 0 : i32
    return %10, %c0_i32_4 : i32, i32
  }
  func.func @transform_2(%arg0: i32, %arg1: i32) -> (i32, i32) {
    %c0_i32 = arith.constant 0 : i32
    %c0_i32_0 = arith.constant 0 : i32
    return %arg1, %c0_i32 : i32, i32
  }
  func.func @transform_3(%arg0: i32, %arg1: i32) -> (i32, i32) {
    %c0_i32 = arith.constant 0 : i32
    %c0_i32_0 = arith.constant 0 : i32
    return %arg0, %c0_i32 : i32, i32
  }
}

</mosaic_0001>

<llo_original>
// kernel: tpu_custom_call.1
$region0: #{tpu_custom_call.1}
  #allocation0 [shape = 'u32[]', space=smem, size = 0x4, offset = 0x4, fixed_abs, tag = 'smem constant byte address 0x4 - core index']
  #allocation1 [shape = 'u32[72,128]{1,0:T(1,128)}', space=vmem, size = 0x9000, scoped, tag = 'internal scratch']
  #allocation2 [shape = 'f32[8,1]{1,0:T(8,128)}', space=vmem, size = 0x1000, scoped, tag = 'scratch operand']
  #allocation3 [shape = 'f32[8,1]{1,0:T(8,128)}', space=vmem, size = 0x1000, scoped, tag = 'scratch operand']
  %s0 = inlined_call_operand.hbm [shape: f32[16,128], index: 0, kind: input, shape index: {}]
  %s1 = inlined_call_operand.hbm [shape: f32[16,128], index: 1, kind: input, shape index: {}]
  %s2 = inlined_call_operand.hbm [shape: f32[16,128], index: 2, kind: input, shape index: {}]
  %s3 = inlined_call_operand.vmem [shape: f32[16,1], index: 3, kind: output, shape index: {}]
  %s4 = sld [smem:[#allocation0]]
  $region69: #{tpu_custom_call.1} parent=0
    _
  %s6 = ssub.s32 1, %s4
  %s7 = scalar_select 0, %s6, %s4
  $region1: #{tpu_custom_call.1} parent=0
    #allocation4 [shape = 'u8[8192]{0}', space=vmem, size = 0x2000, scoped, tag = 'input window, operand 0']
    #allocation5 [shape = 's32[2]{0}', space=sflag, size = 0x8, scoped, tag = 'scoped memory for tpu_custom_call.1']
    #allocation6 [shape = 'u8[8192]{0}', space=vmem, size = 0x2000, scoped, tag = 'input window, operand 1']
    #allocation7 [shape = 's32[2]{0}', space=sflag, size = 0x8, scoped, tag = 'scoped memory for tpu_custom_call.1']
    #allocation8 [shape = 'u8[8192]{0}', space=vmem, size = 0x2000, scoped, tag = 'input window, operand 2']
    %8 = vsyncpa [#allocation5], 0
    %s9 = scalar_lea.sflag [#allocation5], 1
    %10 = vsyncpa %s9, 0
    %11 = vsyncpa [#allocation7], 0
    %s12 = scalar_lea.sflag [#allocation7], 1
    %13 = vsyncpa %s12, 0
    loop: start=0, step=1, limit=6
    $region2: #{tpu_custom_call.1} parent=1 // loop_pre_header
      _
    $region3: #{tpu_custom_call.1} parent=1 // loop_header
      %s15 = sphi 0, %s19
      %p16 = scmp.ge.s32.totalorder %s15, 6
      %s22 = sphi 0, %s34
      %s23 = sphi 0, %s30
      %s24 = sphi 0, %s22
      %s25 = sphi 0, %s23
      %s26 = sphi 0, %s24
      %s27 = sphi 0, %s25
      %s37 = sphi 0, %s39
      %s40 = sphi 0, %s37
      %s41 = sphi 0, %s40
      %s57 = sphi 0, %s41
      %s89 = sphi 0, %s91
      %s92 = sphi 0, %s89
      %s93 = sphi 0, %s92
      %s109 = sphi 0, %s93
      %s115 = sphi 0, %s117
      %s118 = sphi 0, %s115
      %s119 = sphi 0, %s118
      %s135 = sphi 0, %s119
      %s141 = sphi 0, %s143
      %s144 = sphi 0, %s141
      %s145 = sphi 0, %s144
      %s161 = sphi 0, %s145
    $region4: #{tpu_custom_call.1} parent=1 // loop_header_branch
      %18 = sbr.rel (%p16) target = $region8
    $region5: #{tpu_custom_call.1} parent=1 // loop_body
      %s20 = ssub.s32 %s15, 1
      %s21 = ssub.s32 %s15, 2
      %s28 = sadd.s32 1, %s23
      %p29 = scmp.ge.s32.totalorder %s28, 2
      %s30 = scalar_select %p29, 0, %s28
      %s31 = sadd.s32 1, %s22
      %s32 = scalar_select %p29, %s31, %s22
      %p33 = scmp.ge.s32.totalorder %s32, 2
      %s34 = scalar_select %p33, 0, %s32
      %s35 = ssub.s32 %s22, %s34
      %p36 = scmp.eq.s32.totalorder %s35, 0
      %s38 = sadd.s32 %s37, 1
      %s39 = scalar_select %p36, %s37, %s38
      %p42 = pneg %p36
      %p43 = scmp.eq.s32.totalorder %s15, 3
      %p44 = por %p42, %p43
      %p45 = scmp.ne.s32.totalorder %s37, %s40
      %p46 = scmp.eq.s32.totalorder %s15, 0
      %p47 = por %p45, %p46
      %p48 = scmp.ne.s32.totalorder %s37, %s40
      %p49 = scmp.eq.s32.totalorder %s20, 3
      %p50 = por %p48, %p49
      %p51 = scmp.ne.s32.totalorder %s40, %s41
      %p52 = scmp.eq.s32.totalorder %s20, 0
      %p53 = por %p51, %p52
      %p54 = scmp.ne.s32.totalorder %s40, %s41
      %p55 = scmp.eq.s32.totalorder %s21, 3
      %p56 = por %p54, %p55
      %p58 = scmp.ne.s32.totalorder %s41, %s57
      %p59 = scmp.eq.s32.totalorder %s21, 0
      %p60 = por %p58, %p59
      %s61 = sadd.s32 %s22, 1
      %p62 = scmp.lt.s32.totalorder %s61, 0
      %s63 = ssub.s32 0, %s61
      %s64 = scalar_select %p62, %s63, %s61
      %s65 = sand.u32 %s64, 1
      %s66 = ssub.s32 0, %s65
      %s67 = scalar_select %p62, %s66, %s65
      %p68 = scmp.ne.s32.totalorder %s67, 0
      %p69 = scmp.lt.s32.totalorder %s67, 0
      %p70 = pnand %p69, %p68
      %p71 = pneg %p70
      %s72 = sadd.s32 %s67, 2
      %s73 = scalar_select %p71, %s72, %s67
      %s74 = sadd.s32 %s34, 1
      %p75 = scmp.lt.s32.totalorder %s74, 0
      %s76 = ssub.s32 0, %s74
      %s77 = scalar_select %p75, %s76, %s74
      %s78 = sand.u32 %s77, 1
      %s79 = ssub.s32 0, %s78
      %s80 = scalar_select %p75, %s79, %s78
      %p81 = scmp.ne.s32.totalorder %s80, 0
      %p82 = scmp.lt.s32.totalorder %s80, 0
      %p83 = pnand %p82, %p81
      %p84 = pneg %p83
      %s85 = sadd.s32 %s80, 2
      %s86 = scalar_select %p84, %s85, %s80
      %s87 = ssub.s32 %s73, %s86
      %p88 = scmp.eq.s32.totalorder %s87, 0
      %s90 = sadd.s32 %s89, 1
      %s91 = scalar_select %p88, %s89, %s90
      %p94 = pneg %p88
      %p95 = scmp.eq.s32.totalorder %s15, 3
      %p96 = por %p94, %p95
      %p97 = scmp.ne.s32.totalorder %s89, %s92
      %p98 = scmp.eq.s32.totalorder %s15, 0
      %p99 = por %p97, %p98
      %p100 = scmp.ne.s32.totalorder %s89, %s92
      %p101 = scmp.eq.s32.totalorder %s20, 3
      %p102 = por %p100, %p101
      %p103 = scmp.ne.s32.totalorder %s92, %s93
      %p104 = scmp.eq.s32.totalorder %s20, 0
      %p105 = por %p103, %p104
      %p106 = scmp.ne.s32.totalorder %s92, %s93
      %p107 = scmp.eq.s32.totalorder %s21, 3
      %p108 = por %p106, %p107
      %p110 = scmp.ne.s32.totalorder %s93, %s109
      %p111 = scmp.eq.s32.totalorder %s21, 0
      %p112 = por %p110, %p111
      %s113 = ssub.s32 %s23, %s30
      %p114 = scmp.eq.s32.totalorder %s113, 0
      %s116 = sadd.s32 %s115, 1
      %s117 = scalar_select %p114, %s115, %s116
      %p120 = pneg %p114
      %p121 = scmp.eq.s32.totalorder %s15, 3
      %p122 = por %p120, %p121
      %p123 = scmp.ne.s32.totalorder %s115, %s118
      %p124 = scmp.eq.s32.totalorder %s15, 0
      %p125 = por %p123, %p124
      %p126 = scmp.ne.s32.totalorder %s115, %s118
      %p127 = scmp.eq.s32.totalorder %s20, 3
      %p128 = por %p126, %p127
      %p129 = scmp.ne.s32.totalorder %s118, %s119
      %p130 = scmp.eq.s32.totalorder %s20, 0
      %p131 = por %p129, %p130
      %p132 = scmp.ne.s32.totalorder %s118, %s119
      %p133 = scmp.eq.s32.totalorder %s21, 3
      %p134 = por %p132, %p133
      %p136 = scmp.ne.s32.totalorder %s119, %s135
      %p137 = scmp.eq.s32.totalorder %s21, 0
      %p138 = por %p136, %p137
      %s139 = ssub.s32 %s22, %s34
      %p140 = scmp.eq.s32.totalorder %s139, 0
      %s142 = sadd.s32 %s141, 1
      %s143 = scalar_select %p140, %s141, %s142
      %p146 = pneg %p140
      %p147 = scmp.eq.s32.totalorder %s15, 3
      %p148 = por %p146, %p147
      %p149 = scmp.ne.s32.totalorder %s141, %s144
      %p150 = scmp.eq.s32.totalorder %s15, 0
      %p151 = por %p149, %p150
      %p152 = scmp.ne.s32.totalorder %s141, %s144
      %p153 = scmp.eq.s32.totalorder %s20, 3
      %p154 = por %p152, %p153
      %p155 = scmp.ne.s32.totalorder %s144, %s145
      %p156 = scmp.eq.s32.totalorder %s20, 0
      %p157 = por %p155, %p156
      %p158 = scmp.ne.s32.totalorder %s144, %s145
      %p159 = scmp.eq.s32.totalorder %s21, 3
      %p160 = por %p158, %p159
      %p162 = scmp.ne.s32.totalorder %s145, %s161
      %p163 = scmp.eq.s32.totalorder %s21, 0
      %p164 = por %p162, %p163
      %p165 = scmp.le.s32.totalorder 1, %s15
      %p166 = scmp.lt.s32.totalorder %s15, 5
      %p167 = pnand %p165, %p166
      %p168 = pneg %p167
      // Predicated region
      $region9: #{tpu_custom_call.1} parent=5 // pred_check
        _
      $region10: #{tpu_custom_call.1} parent=5 // pred_check_branch
        %170 = sbr.rel (%p167) target = $region12
      $region11: #{tpu_custom_call.1} parent=5 // pred_region
        %s171 = ssub.s32 %s15, 1
      $region12: #{tpu_custom_call.1} parent=5 // pred_fallthru
        _
      %p172 = scmp.lt.s32.totalorder %s15, 4
      // Predicated region
      $region13: #{tpu_custom_call.1} parent=5 // pred_check
        %p173 = pneg %p172
      $region14: #{tpu_custom_call.1} parent=5 // pred_check_branch
        %175 = sbr.rel (%p173) target = $region16
      $region15: #{tpu_custom_call.1} parent=5 // pred_region
        // Predicated region
        $region17: #{tpu_custom_call.1} parent=15 // pred_check
          %p176 = pneg %p47
        $region18: #{tpu_custom_call.1} parent=15 // pred_check_branch
          %178 = sbr.rel (%p176) target = $region20
        $region19: #{tpu_custom_call.1} parent=15 // pred_region
          %s179 = sand.u32 %s37, 1
          %s180 = scalar_lea.sflag [#allocation5], %s179
          %s181 = sand.u32 %s37, 1
          %s182 = smul.addr %s181, 8
          %s183 = scalar_lea.vmem [#allocation4], %s182
          %185 = vsyncadd %s180, 0
          %s186 = smul.addr %s22, 8
          %s187 = scalar_lea.hbm %s0, %s186
          %s189 = sshll.u32 %s187, 4
          %s190 = int_to_ptr.hbm [resolvable:$true] %s189
          %s191 = sshll.u32 %s183, 4
          %s192 = int_to_ptr.vmem [resolvable:$true] %s191
          %194 = dma.hbm_to_vmem [thread:$0]  %s190, 128, %s192, %s180
        $region20: #{tpu_custom_call.1} parent=15 // pred_fallthru
          _
        // Predicated region
        $region21: #{tpu_custom_call.1} parent=15 // pred_check
          %p195 = pneg %p99
        $region22: #{tpu_custom_call.1} parent=15 // pred_check_branch
          %197 = sbr.rel (%p195) target = $region24
        $region23: #{tpu_custom_call.1} parent=15 // pred_region
          %s198 = sand.u32 %s15, 1
          %s199 = scalar_lea.sflag [#allocation7], %s198
          %s200 = sand.u32 %s89, 1
          %s201 = smul.addr %s200, 8
          %s202 = scalar_lea.vmem [#allocation6], %s201
          %s203 = sadd.s32 %s22, 1
          %p204 = scmp.lt.s32.totalorder %s203, 0
          %s205 = ssub.s32 0, %s203
          %s206 = scalar_select %p204, %s205, %s203
          %s207 = sand.u32 %s206, 1
          %s208 = ssub.s32 0, %s207
          %s209 = scalar_select %p204, %s208, %s207
          %p210 = scmp.ne.s32.totalorder %s209, 0
          %p211 = scmp.lt.s32.totalorder %s209, 0
          %p212 = pnand %p211, %p210
          %p213 = pneg %p212
          %s214 = sadd.s32 %s209, 2
          %s215 = scalar_select %p213, %s214, %s209
          %217 = vsyncadd %s199, 0
          %s218 = smul.addr %s215, 8
          %s219 = scalar_lea.hbm %s1, %s218
          %s221 = sshll.u32 %s219, 4
          %s222 = int_to_ptr.hbm [resolvable:$true] %s221
          %s223 = sshll.u32 %s202, 4
          %s224 = int_to_ptr.vmem [resolvable:$true] %s223
          %226 = dma.hbm_to_vmem [thread:$0]  %s222, 128, %s224, %s199
        $region24: #{tpu_custom_call.1} parent=15 // pred_fallthru
          _
        // Predicated region
        $region25: #{tpu_custom_call.1} parent=15 // pred_check
          %p227 = pneg %p125
        $region26: #{tpu_custom_call.1} parent=15 // pred_check_branch
          %229 = sbr.rel (%p227) target = $region28
        $region27: #{tpu_custom_call.1} parent=15 // pred_region
          %s230 = sand.u32 %s15, 1
          %s231 = scalar_lea.sflag [#allocation7], %s230
          %s232 = sand.u32 %s115, 1
          %s233 = smul.addr %s232, 8
          %s234 = scalar_lea.vmem [#allocation8], %s233
          %236 = vsyncadd %s231, 0
          %s237 = smul.addr %s23, 8
          %s238 = scalar_lea.hbm %s2, %s237
          %s240 = sshll.u32 %s238, 4
          %s241 = int_to_ptr.hbm [resolvable:$true] %s240
          %s242 = sshll.u32 %s234, 4
          %s243 = int_to_ptr.vmem [resolvable:$true] %s242
          %245 = dma.hbm_to_vmem [thread:$0]  %s241, 128, %s243, %s231
        $region28: #{tpu_custom_call.1} parent=15 // pred_fallthru
          _
      $region16: #{tpu_custom_call.1} parent=5 // pred_fallthru
        _
      %p246 = scmp.le.s32.totalorder 1, %s15
      %p247 = scmp.lt.s32.totalorder %s15, 5
      %p248 = pnand %p246, %p247
      %p249 = pneg %p248
      // Predicated region
      $region29: #{tpu_custom_call.1} parent=5 // pred_check
        _
      $region30: #{tpu_custom_call.1} parent=5 // pred_check_branch
        %251 = sbr.rel (%p248) target = $region32
      $region31: #{tpu_custom_call.1} parent=5 // pred_region
        %s252 = ssub.s32 %s15, 1
        %s253 = sand.u32 %s40, 1
        %s254 = scalar_lea.sflag [#allocation5], %s253
        %s255 = sand.u32 %s40, 1
        %s256 = smul.addr %s255, 8
        %s257 = scalar_lea.vmem [#allocation4], %s256
        // Predicated region
        $region33: #{tpu_custom_call.1} parent=31 // pred_check
          %p258 = pneg %p53
        $region34: #{tpu_custom_call.1} parent=31 // pred_check_branch
          %260 = sbr.rel (%p258) target = $region36
        $region35: #{tpu_custom_call.1} parent=31 // pred_region
          %262 = dma.done %s254, 128
        $region36: #{tpu_custom_call.1} parent=31 // pred_fallthru
          _
        %s263 = sand.u32 %s20, 1
        %s264 = scalar_lea.sflag [#allocation7], %s263
        %s265 = sand.u32 %s92, 1
        %s266 = smul.addr %s265, 8
        %s267 = scalar_lea.vmem [#allocation6], %s266
        // Predicated region
        $region37: #{tpu_custom_call.1} parent=31 // pred_check
          %p268 = pneg %p105
        $region38: #{tpu_custom_call.1} parent=31 // pred_check_branch
          %270 = sbr.rel (%p268) target = $region40
        $region39: #{tpu_custom_call.1} parent=31 // pred_region
          %272 = dma.done %s264, 128
        $region40: #{tpu_custom_call.1} parent=31 // pred_fallthru
          _
        %s273 = sand.u32 %s20, 1
        %s274 = scalar_lea.sflag [#allocation7], %s273
        %s275 = sand.u32 %s118, 1
        %s276 = smul.addr %s275, 8
        %s277 = scalar_lea.vmem [#allocation8], %s276
        // Predicated region
        $region41: #{tpu_custom_call.1} parent=31 // pred_check
          %p278 = pneg %p131
        $region42: #{tpu_custom_call.1} parent=31 // pred_check_branch
          %280 = sbr.rel (%p278) target = $region44
        $region43: #{tpu_custom_call.1} parent=31 // pred_region
          %282 = dma.done %s274, 128
        $region44: #{tpu_custom_call.1} parent=31 // pred_fallthru
          _
        %s283 = sand.u32 %s40, 1
        %s284 = scalar_lea.sflag [#allocation5], %s283
        %s285 = sand.u32 %s40, 1
        %s286 = smul.addr %s285, 8
        %s287 = scalar_lea.vmem [#allocation4], %s286
        %p288 = pneg %p53
        %p289 = pneg %p50
        %s290 = sand.u32 %s20, 1
        %s291 = scalar_lea.sflag [#allocation7], %s290
        %s292 = sand.u32 %s92, 1
        %s293 = smul.addr %s292, 8
        %s294 = scalar_lea.vmem [#allocation6], %s293
        %p295 = pneg %p105
        %p296 = pneg %p102
        %s297 = sand.u32 %s20, 1
        %s298 = scalar_lea.sflag [#allocation7], %s297
        %s299 = sand.u32 %s118, 1
        %s300 = smul.addr %s299, 8
        %s301 = scalar_lea.vmem [#allocation8], %s300
        %p302 = pneg %p131
        %p303 = pneg %p128
        %p304 = pneg %p157
        %p305 = pneg %p154
        %p306 = scmp.lt.s32.totalorder %s24, 1
        %s307 = scalar_select %p306, %s24, 1
        %s308 = smul.addr %s307, 8
        %s309 = scalar_lea.vmem %s3, %s308
        %s310 = sadd.s32 %s24, 1
        %p311 = scmp.lt.s32.totalorder %s310, 0
        %s312 = ssub.s32 0, %s310
        %s313 = scalar_select %p311, %s312, %s310
        %s314 = sand.u32 %s313, 1
        %s315 = ssub.s32 0, %s314
        %s316 = scalar_select %p311, %s315, %s314
        %p317 = scmp.ne.s32.totalorder %s316, 0
        %p318 = scmp.lt.s32.totalorder %s316, 0
        %p319 = pnand %p318, %p317
        %p320 = pneg %p319
        %s321 = sadd.s32 %s316, 2
        %s322 = scalar_select %p320, %s321, %s316
        %p323 = scmp.lt.s32.totalorder %s24, 1
        %s324 = scalar_select %p323, %s24, 1
        %s325 = smul.addr %s324, 8
        %s326 = scalar_lea.vmem %s3, %s325
        %v328 = vld [vmem:[%s257] sm:$0xff]
        %v329 = vmul.f32 %v328, %v328
        %330 = vadd.xlane.f32.xlu0 %v329
        %v331 = vpop.xlane.xlu0 %330
        %v332 = vmax.f32 %v331, 1e-24
        %v333 = vrsqrt.pop %v332
        %v334 = vmul.f32 %v333, %v332
        %v335 = vmul.f32 %v334, %v333
        %v336 = vmul.f32 0.5, %v335
        %v337 = vsub.f32 1.5, %v336
        %v338 = vmul.f32 %v333, %v337
        %vm339 = vweird.f32 %v332
        %vm340 = vweird.f32 %v333
        %vm341 = vmor %vm339, %vm340
        %v342 = vsel %vm341, %v333, %v338
        %v343 = vmul.f32 %v328, %v342
        %p344 = scmp.eq.s32.totalorder %s25, 0
        // Predicated region
        $region45: #{tpu_custom_call.1} parent=31 // pred_check
          %p345 = pneg %p344
        $region46: #{tpu_custom_call.1} parent=31 // pred_check_branch
          %347 = sbr.rel (%p345) target = $region48
        $region47: #{tpu_custom_call.1} parent=31 // pred_region
          %vm348 = vcmask 7168
          %349 = vst.msk [vmem:[#allocation2] sm:$0xff] %vm348, 0.0
          %v350 = vld [vmem:[%s267] sm:$0xff]
          %v351 = vmul.f32 %v350, %v350
          %352 = vadd.xlane.f32.xlu0 %v351
          %v353 = vpop.xlane.xlu0 %352
          %v354 = vmax.f32 %v353, 1e-24
          %v355 = vrsqrt.pop %v354
          %v356 = vmul.f32 %v355, %v354
          %v357 = vmul.f32 %v356, %v355
          %v358 = vmul.f32 0.5, %v357
          %v359 = vsub.f32 1.5, %v358
          %v360 = vmul.f32 %v355, %v359
          %vm361 = vweird.f32 %v354
          %vm362 = vweird.f32 %v355
          %vm363 = vmor %vm361, %vm362
          %v364 = vsel %vm363, %v355, %v360
          %v365 = vmul.f32 %v350, %v364
          %v366 = vmul.f32 %v343, %v365
          %367 = vadd.xlane.f32.xlu0 %v366
          %v368 = vpop.xlane.xlu0 %367
          %369 = vst.msk [vmem:[#allocation3] sm:$0xff] %vm348, %v368
        $region48: #{tpu_custom_call.1} parent=31 // pred_fallthru
          _
        %v370 = vld [vmem:[%s277] sm:$0xff]
        %v371 = vmul.f32 %v370, %v370
        %372 = vadd.xlane.f32.xlu0 %v371
        %v373 = vpop.xlane.xlu0 %372
        %v374 = vmax.f32 %v373, 1e-24
        %v375 = vrsqrt.pop %v374
        %v376 = vmul.f32 %v375, %v374
        %v377 = vmul.f32 %v376, %v375
        %v378 = vmul.f32 0.5, %v377
        %v379 = vsub.f32 1.5, %v378
        %v380 = vmul.f32 %v375, %v379
        %vm381 = vweird.f32 %v374
        %vm382 = vweird.f32 %v375
        %vm383 = vmor %vm381, %vm382
        %v384 = vsel %vm383, %v375, %v380
        %v385 = vmul.f32 %v370, %v384
        %v386 = vpack.c.bf16 %v343, %v343
        %v387 = vpack.c.bf16 %v385, %v385
        %388 = vmatpush.bf16.xpose.msra.mxu0 0
        %389 = vmatpush.bf16.xpose.msra.mxu0 0
        %390 = vmatpush.bf16.xpose.msra.mxu0 0
        %391 = vmatpush.bf16.xpose.msra.mxu0 0
        %392 = vmatpush.bf16.xpose.msra.mxu0 0
        %393 = vmatpush.bf16.xpose.msra.mxu0 0
        %394 = vmatpush.bf16.xpose.msra.mxu0 0
        %395 = vmatpush.bf16.xpose.msra.mxu0 %v387
        %396 = vmatmul.bf16.gmra.mxu0 %v386
        %v397 = vpop.f32.mrf.mxu0
        %v398 = vadd.f32 0.0, %v397
        %v399 = vpop.f32.mrf.mxu0
        %400 = vdwg.mxu0
        %v401 = vmul.f32 %v398, 2.0
        %v402 = vmul.f32 %v401, 1.442695
        %v403 = vpow.pop %v402
        %v404 = vld [vmem:[#allocation2] sm:$0xff]
        %vm405 = vcmask 64512
        %v406 = vsel %vm405, %v403, 0.0
        %407 = vadd.xlane.f32.xlu0 %v406
        %v408 = vpop.xlane.xlu0 %407
        %v409 = vadd.f32 %v404, %v408
        %vm410 = vcmask 7168
        %411 = vst.msk [vmem:[#allocation2] sm:$0xff] %vm410, %v409
        %s412 = smul.u32 %s24, 8
        %s413 = smul.u32 %s25, 8
        %s414 = sadd.s32 %s413, 8
        %p415 = scmp.lt.s32.totalorder %s412, %s414
        %s416 = sadd.s32 %s412, 8
        %p417 = scmp.lt.s32.totalorder %s413, %s416
        %p418 = pnand %p415, %p417
        %p419 = pneg %p418
        // Predicated region
        $region49: #{tpu_custom_call.1} parent=31 // pred_check
          _
        $region50: #{tpu_custom_call.1} parent=31 // pred_check_branch
          %421 = sbr.rel (%p418) target = $region52
        $region51: #{tpu_custom_call.1} parent=31 // pred_region
          %v422 = vlaneseq
          %v423 = vshrl.u32 %v422, 7
          %v424 = vstv %s412
          %v425 = vadd.s32 %v424, %v423
          %v426 = vlaneseq
          %v427 = vand.u32 %v426, 127
          %v428 = vstv %s413
          %v429 = vadd.s32 %v428, %v427
          %v430 = vld [vmem:[#allocation2] sm:$0xff]
          %vm431 = vcmp.eq.s32.totalorder %v425, %v429
          %v432 = vsel %vm431, %v403, 0.0
          %v433 = vsel %vm405, %v432, 0.0
          %434 = vadd.xlane.f32.xlu0 %v433
          %v435 = vpop.xlane.xlu0 %434
          %v436 = vsub.f32 %v430, %v435
          %437 = vst.msk [vmem:[#allocation2] sm:$0xff] %vm410, %v436
        $region52: #{tpu_custom_call.1} parent=31 // pred_fallthru
          _
        %p438 = scmp.eq.s32.totalorder %s25, 1
        // Predicated region
        $region53: #{tpu_custom_call.1} parent=31 // pred_check
          %p439 = pneg %p438
        $region54: #{tpu_custom_call.1} parent=31 // pred_check_branch
          %441 = sbr.rel (%p439) target = $region56
        $region55: #{tpu_custom_call.1} parent=31 // pred_region
          %v442 = vld [vmem:[#allocation2] sm:$0xff]
          %v443 = vlog2.pop %v442
          %v444 = vmul.f32 %v443, 0.6931472
          %v445 = vld [vmem:[#allocation3] sm:$0xff]
          %v446 = vmul.f32 %v445, 2.0
          %v447 = vsub.f32 %v444, %v446
          %448 = vst.msk [vmem:[%s326] sm:$0xff] %vm410, %v447
        $region56: #{tpu_custom_call.1} parent=31 // pred_fallthru
          _
        %p449 = scmp.lt.s32.totalorder %s24, 1
        %s450 = scalar_select %p449, %s24, 1
        %s451 = smul.addr %s450, 8
        %s452 = scalar_lea.vmem %s3, %s451
        // Predicated region
        $region57: #{tpu_custom_call.1} parent=31 // pred_check
          %p453 = pneg %p154
        $region58: #{tpu_custom_call.1} parent=31 // pred_check_branch
          %455 = sbr.rel (%p453) target = $region60
        $region59: #{tpu_custom_call.1} parent=31 // pred_region
          _
        $region60: #{tpu_custom_call.1} parent=31 // pred_fallthru
          _
      $region32: #{tpu_custom_call.1} parent=5 // pred_fallthru
        _
      %p456 = scmp.le.s32.totalorder 2, %s15
      // Predicated region
      $region61: #{tpu_custom_call.1} parent=5 // pred_check
        %p457 = pneg %p456
      $region62: #{tpu_custom_call.1} parent=5 // pred_check_branch
        %459 = sbr.rel (%p457) target = $region64
      $region63: #{tpu_custom_call.1} parent=5 // pred_region
        %s460 = ssub.s32 %s15, 2
        // Predicated region
        $region65: #{tpu_custom_call.1} parent=63 // pred_check
          %p461 = pneg %p160
        $region66: #{tpu_custom_call.1} parent=63 // pred_check_branch
          %463 = sbr.rel (%p461) target = $region68
        $region67: #{tpu_custom_call.1} parent=63 // pred_region
          %p464 = scmp.lt.s32.totalorder %s26, 1
          %s465 = scalar_select %p464, %s26, 1
          %s466 = smul.addr %s465, 8
          %s467 = scalar_lea.vmem %s3, %s466
        $region68: #{tpu_custom_call.1} parent=63 // pred_fallthru
          _
      $region64: #{tpu_custom_call.1} parent=5 // pred_fallthru
        _
    $region6: #{tpu_custom_call.1} parent=1 // loop_footer
      %s19 = sadd.s32 1, %s15
    $region7: #{tpu_custom_call.1} parent=1 // loop_footer_branch
      %14 = sbr.rel target = $region3
    $region8: #{tpu_custom_call.1} parent=1 // loop_exit
      _
    %468 = vsyncpa [#allocation5], 1
    %s469 = scalar_lea.sflag [#allocation5], 1
    %470 = vsyncpa %s469, 1
    %471 = vsyncpa [#allocation7], 1
    %s472 = scalar_lea.sflag [#allocation7], 1
    %473 = vsyncpa %s472, 1

</llo_original>
